<compile_context>
chip_gen: v5e
topology: v5e:2x2
jax: 0.10.0
libtpu: 0.0.40
codegen_flags: <defaults>
</compile_context>

<pallas_src>
import functools

import jax
import jax.numpy as jnp
from jax.experimental import pallas as pl
from jax.experimental.pallas import tpu as pltpu

_LANE = 128


def _round_up(a, b):
    return ((a + b - 1) // b) * b


def _sage_layer_kernel(a_ref, xsrc_ref, xdst_ref, invdeg_ref, w_ref, b_ref,
                       o_ref, acc_ref, *, negative_slope):
    """One SAGEConv layer on a (TM, H_out) output row-tile.

    grid = (row_tiles, src_tiles); the src (k) axis is the mean-aggregation
    reduction.  acc_ref accumulates A_tile @ x_src_tile (bf16 x bf16 -> f32 MXU)
    in f32; on the last k step the aggregate is scaled by 1/deg and pushed
    through two matmuls against the static halves of the resident fused
    [W_l; W_r] weight (no lane-dim concatenate).
    """
    k = pl.program_id(1)

    @pl.when(k == 0)
    def _():
        acc_ref[...] = jnp.zeros_like(acc_ref)

    # Native bf16 x bf16 contraction with f32 accumulation on the MXU.
    acc_ref[...] += jnp.dot(a_ref[...], xsrc_ref[...],
                            preferred_element_type=jnp.float32)   # (TM, F) f32

    @pl.when(k == pl.num_programs(1) - 1)
    def _():
        f_in = xsrc_ref.shape[1]                                  # static
        agg = acc_ref[...] * invdeg_ref[...]                      # mean aggregation
        # Aggregated-neighbour path: f32 agg @ f32 W_l (once per row tile).
        h = jnp.dot(agg, w_ref[:f_in, :],
                    preferred_element_type=jnp.float32)
        # Root path: bf16 x_dst upcast once per row tile, @ f32 W_r.
        h = h + jnp.dot(xdst_ref[...].astype(jnp.float32), w_ref[f_in:, :],
                        preferred_element_type=jnp.float32)
        h = h + b_ref[...]
        if negative_slope is not None:
            h = jnp.maximum(h, negative_slope * h)                # leaky_relu
        o_ref[...] = h.astype(o_ref.dtype)


def _sage_layer(a_pad, inv_deg, x_pad, w_fused, b_pad, *, negative_slope,
                tm, tk, out_dtype):
    n_pad = a_pad.shape[0]
    f_pad = x_pad.shape[1]
    h_pad = w_fused.shape[1]
    grid = (n_pad // tm, n_pad // tk)

    kernel = functools.partial(_sage_layer_kernel, negative_slope=negative_slope)
    return pl.pallas_call(
        kernel,
        out_shape=jax.ShapeDtypeStruct((n_pad, h_pad), out_dtype),
        grid_spec=pltpu.PrefetchScalarGridSpec(
            num_scalar_prefetch=0,
            grid=grid,
            in_specs=[
                pl.BlockSpec((tm, tk), lambda i, k: (i, k)),            # adjacency stream (bf16)
                pl.BlockSpec((tk, f_pad), lambda i, k: (k, 0)),         # source features (bf16)
                pl.BlockSpec((tm, f_pad), lambda i, k: (i, 0)),         # root features (bf16)
                pl.BlockSpec((tm, 1), lambda i, k: (i, 0)),             # 1/deg (f32)
                pl.BlockSpec((2 * f_pad, h_pad), lambda i, k: (0, 0)),  # fused [W_l;W_r] (resident)
                pl.BlockSpec((1, h_pad), lambda i, k: (0, 0)),          # bias (resident)
            ],
            out_specs=pl.BlockSpec((tm, h_pad), lambda i, k: (i, 0)),
            scratch_shapes=[pltpu.VMEM((tm, f_pad), jnp.float32)],
        ),
        compiler_params=pltpu.CompilerParams(
            dimension_semantics=("parallel", "arbitrary"),
            vmem_limit_bytes=48 * 1024 * 1024,   # big-tile working set << 48 MiB; v7x-safe
        ),
    )(a_pad, x_pad, x_pad, inv_deg, w_fused, b_pad)


def _pick_tiles(n):
    """Tile sizes + padded N.  Single tile for small graphs; 512 x 1024/2048 row/src
    tiles otherwise (keeps >= 2 row tiles for v7x's 2 TCs, double-buffered set
    well inside 48 MiB)."""
    if n <= 1024:
        n_pad = _round_up(n, _LANE)
        return n_pad, n_pad, n_pad
    if n <= 4096:
        tm, tk = 512, 1024
    else:
        tm, tk = 512, 2048
    n_pad = _round_up(n, tk)   # tk is a multiple of tm
    return n_pad, tm, tk


def gnn_forward(x, edge_index, params):
    """x: (N, F) float32. edge_index: (2, E) int32 (row 0 = src, row 1 = dst)."""
    n, f = x.shape
    w1l, w1r, b1, w2l, w2r, b2 = params
    hidden = w1l.shape[1]

    n_pad, tm, tk = _pick_tiles(n)
    f_pad = _round_up(f, _LANE)
    h_pad = _round_up(hidden, _LANE)

    src, dst = edge_index[0], edge_index[1]
    e = src.shape[0]

    # Un-normalized dense adjacency (message flow src -> dst), built directly in
    # bf16 (exact for per-pair edge multiplicity <= 256) -- no f32 N^2 intermediate.
    adj_bf16 = jnp.zeros((n_pad, n_pad), jnp.bfloat16).at[dst, src].add(
        jnp.ones((e,), jnp.bfloat16))
    # Degrees via an O(E) scatter over destinations (== row sums of adj).
    deg = jnp.zeros((n_pad,), jnp.float32).at[dst].add(1.0)
    inv_deg = jnp.where(deg > 0, 1.0 / deg, 0.0).reshape(n_pad, 1).astype(jnp.float32)

    # Streamed node features in bf16 (halves x_src re-stream traffic).
    x_pad = jnp.zeros((n_pad, f_pad), jnp.bfloat16).at[:n, :f].set(
        x.astype(jnp.bfloat16))

    def fuse(wl, wr, b, in_dim, in_pad, out_pad):
        out_dim = wl.shape[1]
        wl_p = jnp.zeros((in_pad, out_pad), jnp.float32).at[:in_dim, :out_dim].set(wl)
        wr_p = jnp.zeros((in_pad, out_pad), jnp.float32).at[:in_dim, :out_dim].set(wr)
        w = jnp.concatenate([wl_p, wr_p], axis=0)                # (2*in_pad, out_pad)
        b_p = jnp.zeros((1, out_pad), jnp.float32).at[:, :out_dim].set(b)
        return w, b_p

    w1, b1p = fuse(w1l, w1r, b1, f, f_pad, h_pad)
    w2, b2p = fuse(w2l, w2r, b2, hidden, h_pad, h_pad)

    # conv1 + leaky_relu(0.2); h1 kept in bf16 (it is re-streamed by conv2's aggregation).
    h1 = _sage_layer(adj_bf16, inv_deg, x_pad, w1, b1p,
                     negative_slope=0.2, tm=tm, tk=tk, out_dtype=jnp.bfloat16)
    # conv2 (no activation), final output in f32.
    out = _sage_layer(adj_bf16, inv_deg, h1, w2, b2p,
                      negative_slope=None, tm=tm, tk=tk, out_dtype=jnp.float32)
    return out[:n, :hidden]


def init_params(key, num_features, hidden_channels):
    """Deterministic synthetic parameters.
    Weights stored as (in, out); lin_l has bias, lin_r has no bias (PyG default).
    conv3 / conv4 exist in the module but are unused in forward, so omitted."""
    ks = jax.random.split(key, 6)

    def lin(k, fan_in, fan_out):
        bound = 1.0 / jnp.sqrt(fan_in)
        return jax.random.uniform(k, (fan_in, fan_out), jnp.float32, -bound, bound)

    w1l = lin(ks[0], num_features, hidden_channels)
    w1r = lin(ks[1], num_features, hidden_channels)
    b1 = jax.random.uniform(ks[2], (1, hidden_channels), jnp.float32,
                            -1.0 / jnp.sqrt(num_features), 1.0 / jnp.sqrt(num_features))
    w2l = lin(ks[3], hidden_channels, hidden_channels)
    w2r = lin(ks[4], hidden_channels, hidden_channels)
    b2 = jax.random.uniform(ks[5], (1, hidden_channels), jnp.float32,
                            -1.0 / jnp.sqrt(hidden_channels), 1.0 / jnp.sqrt(hidden_channels))
    return (w1l, w1r, b1, w2l, w2r, b2)


def _reference(x, edge_index, params):
    """Plain-JAX f32 reference for sanity checking."""
    n = x.shape[0]
    src, dst = edge_index[0], edge_index[1]
    adj = jnp.zeros((n, n), jnp.float32).at[dst, src].add(1.0)
    deg = jnp.sum(adj, axis=1, keepdims=True)
    a = adj / jnp.where(deg > 0, deg, 1.0)
    w1l, w1r, b1, w2l, w2r, b2 = params
    h1 = (a @ x) @ w1l + x @ w1r + b1
    h1 = jnp.where(h1 >= 0, h1, 0.2 * h1)
    return (a @ h1) @ w2l + h1 @ w2r + b2


if __name__ == "__main__":
    key = jax.random.PRNGKey(0)
    k_x, k_e, k_p = jax.random.split(key, 3)

    num_nodes = 16
    num_features = 8
    hidden_channels = 32
    num_edges = 40

    x = jax.random.normal(k_x, (num_nodes, num_features), jnp.float32)
    edge_index = jax.random.randint(k_e, (2, num_edges), 0, num_nodes, jnp.int32)
    params = init_params(k_p, num_features, hidden_channels)

    out = gnn_forward(x, edge_index, params)
    out = jax.block_until_ready(out)

    ref = _reference(x, edge_index, params)
    assert out.shape == (num_nodes, hidden_channels)
    # bf16 streamed features / h1 -> loosened tolerance (expected precision, not a bug).
    assert jnp.allclose(out, ref, atol=5e-2, rtol=5e-2), float(jnp.max(jnp.abs(out - ref)))

    print("KERNEL_OK")
</pallas_src>

<mosaic_0001>
module attributes {stable_mosaic.version = 11 : i64} {
  func.func @_sage_layer_kernel(%arg0: i32, %arg1: i32, %arg2: memref<128x128xbf16, #tpu.memory_space<vmem>>, %arg3: memref<128x128xbf16, #tpu.memory_space<vmem>>, %arg4: memref<128x128xbf16, #tpu.memory_space<vmem>>, %arg5: memref<128x1xf32, #tpu.memory_space<vmem>>, %arg6: memref<256x128xf32, #tpu.memory_space<vmem>>, %arg7: memref<1x128xf32, #tpu.memory_space<vmem>>, %arg8: memref<128x128xbf16, #tpu.memory_space<vmem>>, %arg9: memref<128x128xf32, #tpu.memory_space<vmem>>) attributes {dimension_semantics = [#tpu.dimension_semantics<parallel>, #tpu.dimension_semantics<arbitrary>], iteration_bounds = array<i64: 1, 1>, scalar_prefetch = 0 : i64, scratch_operands = 1 : i64, tpu.core_type = #tpu.core_type<tc>, window_params = [{transform_indices = @transform_0, window_bounds = array<i64: 128, 128>}, {transform_indices = @transform_1, window_bounds = array<i64: 128, 128>}, {transform_indices = @transform_2, window_bounds = array<i64: 128, 128>}, {transform_indices = @transform_3, window_bounds = array<i64: 128, 1>}, {pipeline_mode = #tpu.pipeline_mode<synchronous>, transform_indices = @transform_4, window_bounds = array<i64: 256, 128>}, {pipeline_mode = #tpu.pipeline_mode<synchronous>, transform_indices = @transform_5, window_bounds = array<i64: 1, 128>}, {transform_indices = @transform_6, window_bounds = array<i64: 128, 128>}]} {
    %c0_i32 = arith.constant 0 : i32
    %0 = arith.cmpi eq, %arg1, %c0_i32 : i32
    %1 = arith.extui %0 : i1 to i32
    %c0_i32_0 = arith.constant 0 : i32
    %2 = arith.cmpi ne, %1, %c0_i32_0 : i32
    scf.if %2 {
      %cst_10 = arith.constant 0.000000e+00 : f32
      %12 = vector.broadcast %cst_10 : f32 to vector<128x128xf32>
      %c0_11 = arith.constant 0 : index
      %c0_12 = arith.constant 0 : index
      %13 = vector.load %arg9[%c0_11, %c0_12] : memref<128x128xf32, #tpu.memory_space<vmem>>, vector<128x128xf32>
      tpu.vector_store %arg9[%c0_11, %c0_12], %12 {strides = array<i32>} : memref<128x128xf32, #tpu.memory_space<vmem>>, vector<128x128xf32>,
    } else {
    }
    %c0 = arith.constant 0 : index
    %c0_1 = arith.constant 0 : index
    %3 = vector.load %arg9[%c0, %c0_1] : memref<128x128xf32, #tpu.memory_space<vmem>>, vector<128x128xf32>
    %c0_2 = arith.constant 0 : index
    %c0_3 = arith.constant 0 : index
    %4 = vector.load %arg2[%c0_2, %c0_3] : memref<128x128xbf16, #tpu.memory_space<vmem>>, vector<128x128xbf16>
    %c0_4 = arith.constant 0 : index
    %c0_5 = arith.constant 0 : index
    %5 = vector.load %arg3[%c0_4, %c0_5] : memref<128x128xbf16, #tpu.memory_space<vmem>>, vector<128x128xbf16>
    %cst = arith.constant dense<0.000000e+00> : vector<128x128xf32>
    %6 = tpu.matmul %4, %5, %cst {dimension_numbers = #tpu.dot_dimension_numbers<[1], [0], [0], [1], [0, 0, 1, 1], [], []>} : vector<128x128xbf16>, vector<128x128xbf16>, vector<128x128xf32> -> vector<128x128xf32>
    %7 = arith.addf %3, %6 : vector<128x128xf32>
    %c0_6 = arith.constant 0 : index
    %c0_7 = arith.constant 0 : index
    %8 = vector.load %arg9[%c0_6, %c0_7] : memref<128x128xf32, #tpu.memory_space<vmem>>, vector<128x128xf32>
    tpu.vector_store %arg9[%c0_6, %c0_7], %7 {strides = array<i32>} : memref<128x128xf32, #tpu.memory_space<vmem>>, vector<128x128xf32>,
    %c0_i32_8 = arith.constant 0 : i32
    %9 = arith.cmpi eq, %arg1, %c0_i32_8 : i32
    %10 = arith.extui %9 : i1 to i32
    %c0_i32_9 = arith.constant 0 : i32
    %11 = arith.cmpi ne, %10, %c0_i32_9 : i32
    scf.if %11 {
      %c0_10 = arith.constant 0 : index
      %c0_11 = arith.constant 0 : index
      %12 = vector.load %arg9[%c0_10, %c0_11] : memref<128x128xf32, #tpu.memory_space<vmem>>, vector<128x128xf32>
      %c0_12 = arith.constant 0 : index
      %c0_13 = arith.constant 0 : index
      %13 = vector.load %arg5[%c0_12, %c0_13] : memref<128x1xf32, #tpu.memory_space<vmem>>, vector<128x1xf32>
      %14 = vector.broadcast %13 : vector<128x1xf32> to vector<128x128xf32>
      %15 = arith.mulf %12, %14 : vector<128x128xf32>
      %c0_14 = arith.constant 0 : index
      %c0_15 = arith.constant 0 : index
      %16 = vector.load %arg6[%c0_14, %c0_15] : memref<256x128xf32, #tpu.memory_space<vmem>>, vector<128x128xf32>
      %cst_16 = arith.constant dense<0.000000e+00> : vector<128x128xf32>
      %17 = tpu.matmul %15, %16, %cst_16 {dimension_numbers = #tpu.dot_dimension_numbers<[1], [0], [0], [1], [0, 0, 1, 1], [], []>} : vector<128x128xf32>, vector<128x128xf32>, vector<128x128xf32> -> vector<128x128xf32>
      %c0_17 = arith.constant 0 : index
      %c0_18 = arith.constant 0 : index
      %18 = vector.load %arg4[%c0_17, %c0_18] : memref<128x128xbf16, #tpu.memory_space<vmem>>, vector<128x128xbf16>
      %19 = arith.extf %18 : vector<128x128xbf16> to vector<128x128xf32>
      %c128 = arith.constant 128 : index
      %c0_19 = arith.constant 0 : index
      %20 = vector.load %arg6[%c128, %c0_19] : memref<256x128xf32, #tpu.memory_space<vmem>>, vector<128x128xf32>
      %cst_20 = arith.constant dense<0.000000e+00> : vector<128x128xf32>
      %21 = tpu.matmul %19, %20, %cst_20 {dimension_numbers = #tpu.dot_dimension_numbers<[1], [0], [0], [1], [0, 0, 1, 1], [], []>} : vector<128x128xf32>, vector<128x128xf32>, vector<128x128xf32> -> vector<128x128xf32>
      %22 = arith.addf %17, %21 : vector<128x128xf32>
      %c0_21 = arith.constant 0 : index
      %c0_22 = arith.constant 0 : index
      %23 = vector.load %arg7[%c0_21, %c0_22] : memref<1x128xf32, #tpu.memory_space<vmem>>, vector<1x128xf32>
      %24 = vector.broadcast %23 : vector<1x128xf32> to vector<128x128xf32>
      %25 = arith.addf %22, %24 : vector<128x128xf32>
      %cst_23 = arith.constant 2.000000e-01 : f32
      %26 = vector.broadcast %cst_23 : f32 to vector<128x128xf32>
      %27 = arith.mulf %26, %25 : vector<128x128xf32>
      %28 = arith.maximumf %25, %27 : vector<128x128xf32>
      %29 = arith.truncf %28 : vector<128x128xf32> to vector<128x128xbf16>
      %c0_24 = arith.constant 0 : index
      %c0_25 = arith.constant 0 : index
      %30 = vector.load %arg8[%c0_24, %c0_25] : memref<128x128xbf16, #tpu.memory_space<vmem>>, vector<128x128xbf16>
      tpu.vector_store %arg8[%c0_24, %c0_25], %29 {strides = array<i32>} : memref<128x128xbf16, #tpu.memory_space<vmem>>, vector<128x128xbf16>,
    } else {
    }
    return
  }
  func.func @transform_0(%arg0: i32, %arg1: i32) -> (i32, i32) {
    %c0_i32 = arith.constant 0 : i32
    return %arg0, %arg1 : i32, i32
  }
  func.func @transform_1(%arg0: i32, %arg1: i32) -> (i32, i32) {
    %c0_i32 = arith.constant 0 : i32
    %c0_i32_0 = arith.constant 0 : i32
    return %arg1, %c0_i32 : i32, i32
  }
  func.func @transform_2(%arg0: i32, %arg1: i32) -> (i32, i32) {
    %c0_i32 = arith.constant 0 : i32
    %c0_i32_0 = arith.constant 0 : i32
    return %arg0, %c0_i32 : i32, i32
  }
  func.func @transform_3(%arg0: i32, %arg1: i32) -> (i32, i32) {
    %c0_i32 = arith.constant 0 : i32
    %c0_i32_0 = arith.constant 0 : i32
    return %arg0, %c0_i32 : i32, i32
  }
  func.func @transform_4(%arg0: i32, %arg1: i32) -> (i32, i32) {
    %c0_i32 = arith.constant 0 : i32
    %c0_i32_0 = arith.constant 0 : i32
    %c0_i32_1 = arith.constant 0 : i32
    return %c0_i32, %c0_i32_0 : i32, i32
  }
  func.func @transform_5(%arg0: i32, %arg1: i32) -> (i32, i32) {
    %c0_i32 = arith.constant 0 : i32
    %c0_i32_0 = arith.constant 0 : i32
    %c0_i32_1 = arith.constant 0 : i32
    return %c0_i32, %c0_i32_0 : i32, i32
  }
  func.func @transform_6(%arg0: i32, %arg1: i32) -> (i32, i32) {
    %c0_i32 = arith.constant 0 : i32
    %c0_i32_0 = arith.constant 0 : i32
    return %arg0, %c0_i32 : i32, i32
  }
}

</mosaic_0001>

<llo_original>
// kernel: tpu_custom_call.1
$region0: #{tpu_custom_call.1}
  #allocation0 [shape = 'u32[]', space=smem, size = 0x4, offset = 0x4, fixed_abs, tag = 'smem constant byte address 0x4 - core index']
  #allocation1 [shape = 'u32[72,128]{1,0:T(1,128)}', space=vmem, size = 0x9000, scoped, tag = 'internal scratch']
  #allocation2 [shape = 'f32[128,128]{1,0:T(8,128)}', space=vmem, size = 0x10000, scoped, tag = 'scratch operand']
  %s0 = inlined_call_operand.vmem [shape: bf16[128,128], index: 0, kind: input, shape index: {}]
  %s1 = inlined_call_operand.vmem [shape: bf16[128,128], index: 1, kind: input, shape index: {}]
  %s2 = inlined_call_operand.hbm [shape: bf16[128,128], index: 2, kind: input, shape index: {}]
  %s3 = inlined_call_operand.vmem [shape: f32[128,1], index: 3, kind: input, shape index: {}]
  %s4 = inlined_call_operand.hbm [shape: f32[256,128], index: 4, kind: input, shape index: {}]
  %s5 = inlined_call_operand.vmem [shape: f32[1,128], index: 5, kind: input, shape index: {}]
  %s6 = inlined_call_operand.hbm [shape: bf16[128,128], index: 6, kind: output, shape index: {}]
  %s7 = sld [smem:[#allocation0]]
  $region50: #{tpu_custom_call.1} parent=0
    _
  %s9 = ssub.s32 1, %s7
  %s10 = scalar_select 0, %s9, %s7
  $region1: #{tpu_custom_call.1} parent=0
    #allocation3 [shape = 'u8[32768]{0}', space=vmem, size = 0x8000, scoped, tag = 'input window, operand 2, single buffered']
    #allocation4 [shape = 's32[1]{0}', space=sflag, size = 0x4, scoped, tag = 'scoped memory for tpu_custom_call.1']
    #allocation5 [shape = 's32[1]{0}', space=sflag, size = 0x4, scoped, tag = 'scoped memory for tpu_custom_call.1']
    #allocation6 [shape = 'u8[131072]{0}', space=vmem, size = 0x20000, scoped, tag = 'input window, operand 4, single buffered']
    #allocation7 [shape = 's32[1]{0}', space=sflag, size = 0x4, scoped, tag = 'scoped memory for tpu_custom_call.1']
    #allocation8 [shape = 'u8[32768]{0}', space=vmem, size = 0x8000, scoped, tag = 'output window, operand 0, single buffered']
    %11 = vsyncpa [#allocation4], 0
    %12 = vsyncpa [#allocation7], 0
    %13 = vsyncpa [#allocation5], 0
    // Predicated region
    $region2: #{tpu_custom_call.1} parent=1 // pred_check
      _
    $region3: #{tpu_custom_call.1} parent=1 // pred_check_branch
      %15 = sbr.rel (0) target = $region5
    $region4: #{tpu_custom_call.1} parent=1 // pred_region
      _
    $region5: #{tpu_custom_call.1} parent=1 // pred_fallthru
      _
    // Predicated region
    $region6: #{tpu_custom_call.1} parent=1 // pred_check
      _
    $region7: #{tpu_custom_call.1} parent=1 // pred_check_branch
      %17 = sbr.rel (0) target = $region9
    $region8: #{tpu_custom_call.1} parent=1 // pred_region
      _
    $region9: #{tpu_custom_call.1} parent=1 // pred_fallthru
      _
    // Predicated region
    $region10: #{tpu_custom_call.1} parent=1 // pred_check
      _
    $region11: #{tpu_custom_call.1} parent=1 // pred_check_branch
      %19 = sbr.rel (0) target = $region13
    $region12: #{tpu_custom_call.1} parent=1 // pred_region
      %21 = vsyncadd [#allocation4], 0
      %s22 = sshll.u32 %s2, 4
      %s23 = int_to_ptr.hbm [resolvable:$true] %s22
      %s24 = sshll.u32 [#allocation3], 4
      %s25 = int_to_ptr.vmem [resolvable:$true] %s24
      %30 = dma.hbm_to_vmem [thread:$0]  %s23, 1024, %s25, [#allocation4], 64, 64, 4
    $region13: #{tpu_custom_call.1} parent=1 // pred_fallthru
      _
    // Predicated region
    $region14: #{tpu_custom_call.1} parent=1 // pred_check
      _
    $region15: #{tpu_custom_call.1} parent=1 // pred_check_branch
      %32 = sbr.rel (0) target = $region17
    $region16: #{tpu_custom_call.1} parent=1 // pred_region
      _
    $region17: #{tpu_custom_call.1} parent=1 // pred_fallthru
      _
    // Predicated region
    $region18: #{tpu_custom_call.1} parent=1 // pred_check
      _
    $region19: #{tpu_custom_call.1} parent=1 // pred_check_branch
      %34 = sbr.rel (0) target = $region21
    $region20: #{tpu_custom_call.1} parent=1 // pred_region
      %36 = vsyncadd [#allocation7], 0
      %s37 = sshll.u32 %s4, 4
      %s38 = int_to_ptr.hbm [resolvable:$true] %s37
      %s39 = sshll.u32 [#allocation6], 4
      %s40 = int_to_ptr.vmem [resolvable:$true] %s39
      %45 = dma.hbm_to_vmem [thread:$0]  %s38, 4096, %s40, [#allocation7], 128, 128, 8
    $region21: #{tpu_custom_call.1} parent=1 // pred_fallthru
      _
    // Predicated region
    $region22: #{tpu_custom_call.1} parent=1 // pred_check
      _
    $region23: #{tpu_custom_call.1} parent=1 // pred_check_branch
      %47 = sbr.rel (0) target = $region25
    $region24: #{tpu_custom_call.1} parent=1 // pred_region
      _
    $region25: #{tpu_custom_call.1} parent=1 // pred_fallthru
      _
    // Predicated region
    $region26: #{tpu_custom_call.1} parent=1 // pred_check
      _
    $region27: #{tpu_custom_call.1} parent=1 // pred_check_branch
      %49 = sbr.rel (0) target = $region29
    $region28: #{tpu_custom_call.1} parent=1 // pred_region
      %51 = dma.done [#allocation4], 1024
    $region29: #{tpu_custom_call.1} parent=1 // pred_fallthru
      _
    // Predicated region
    $region30: #{tpu_custom_call.1} parent=1 // pred_check
      _
    $region31: #{tpu_custom_call.1} parent=1 // pred_check_branch
      %53 = sbr.rel (0) target = $region33
    $region32: #{tpu_custom_call.1} parent=1 // pred_region
      %55 = dma.done [#allocation7], 4096
    $region33: #{tpu_custom_call.1} parent=1 // pred_fallthru
      _
    %p56 = scmp.eq.s32.totalorder 0, 0
    // Predicated region
    $region34: #{tpu_custom_call.1} parent=1 // pred_check
      %p57 = pneg %p56
    $region35: #{tpu_custom_call.1} parent=1 // pred_check_branch
      %59 = sbr.rel (%p57) target = $region37
    $region36: #{tpu_custom_call.1} parent=1 // pred_region
      %60 = vst [vmem:[#allocation2] sm:$0xff] 0.0
      %61 = vst [vmem:[#allocation2 + $0x8] sm:$0xff] 0.0
      %62 = vst [vmem:[#allocation2 + $0x10] sm:$0xff] 0.0
      %63 = vst [vmem:[#allocation2 + $0x18] sm:$0xff] 0.0
      %64 = vst [vmem:[#allocation2 + $0x20] sm:$0xff] 0.0
      %65 = vst [vmem:[#allocation2 + $0x28] sm:$0xff] 0.0
      %66 = vst [vmem:[#allocation2 + $0x30] sm:$0xff] 0.0
      %67 = vst [vmem:[#allocation2 + $0x38] sm:$0xff] 0.0
      %68 = vst [vmem:[#allocation2 + $0x40] sm:$0xff] 0.0
      %69 = vst [vmem:[#allocation2 + $0x48] sm:$0xff] 0.0
      %70 = vst [vmem:[#allocation2 + $0x50] sm:$0xff] 0.0
      %71 = vst [vmem:[#allocation2 + $0x58] sm:$0xff] 0.0
      %72 = vst [vmem:[#allocation2 + $0x60] sm:$0xff] 0.0
      %73 = vst [vmem:[#allocation2 + $0x68] sm:$0xff] 0.0
      %74 = vst [vmem:[#allocation2 + $0x70] sm:$0xff] 0.0
      %75 = vst [vmem:[#allocation2 + $0x78] sm:$0xff] 0.0
    $region37: #{tpu_custom_call.1} parent=1 // pred_fallthru
      _
    %v76 = vld [vmem:[#allocation2] sm:$0xff]
    %v77 = vld [vmem:[#allocation2 + $0x8] sm:$0xff]
    %v78 = vld [vmem:[#allocation2 + $0x10] sm:$0xff]
    %v79 = vld [vmem:[#allocation2 + $0x18] sm:$0xff]
    %v80 = vld [vmem:[#allocation2 + $0x20] sm:$0xff]
    %v81 = vld [vmem:[#allocation2 + $0x28] sm:$0xff]
    %v82 = vld [vmem:[#allocation2 + $0x30] sm:$0xff]
    %v83 = vld [vmem:[#allocation2 + $0x38] sm:$0xff]
    %v84 = vld [vmem:[#allocation2 + $0x40] sm:$0xff]
    %v85 = vld [vmem:[#allocation2 + $0x48] sm:$0xff]
    %v86 = vld [vmem:[#allocation2 + $0x50] sm:$0xff]
    %v87 = vld [vmem:[#allocation2 + $0x58] sm:$0xff]
    %v88 = vld [vmem:[#allocation2 + $0x60] sm:$0xff]
    %v89 = vld [vmem:[#allocation2 + $0x68] sm:$0xff]
    %v90 = vld [vmem:[#allocation2 + $0x70] sm:$0xff]
    %v91 = vld [vmem:[#allocation2 + $0x78] sm:$0xff]
    %v92 = vld [vmem:[%s0] sm:$0xf]
    %v93 = vld [vmem:[%s0 + $0x4] sm:$0xf]
    %v94 = vld [vmem:[%s0 + $0x8] sm:$0xf]
    %v95 = vld [vmem:[%s0 + $0xc] sm:$0xf]
    %v96 = vld [vmem:[%s0 + $0x10] sm:$0xf]
    %v97 = vld [vmem:[%s0 + $0x14] sm:$0xf]
    %v98 = vld [vmem:[%s0 + $0x18] sm:$0xf]
    %v99 = vld [vmem:[%s0 + $0x1c] sm:$0xf]
    %v100 = vld [vmem:[%s0 + $0x20] sm:$0xf]
    %v101 = vld [vmem:[%s0 + $0x24] sm:$0xf]
    %v102 = vld [vmem:[%s0 + $0x28] sm:$0xf]
    %v103 = vld [vmem:[%s0 + $0x2c] sm:$0xf]
    %v104 = vld [vmem:[%s0 + $0x30] sm:$0xf]
    %v105 = vld [vmem:[%s0 + $0x34] sm:$0xf]
    %v106 = vld [vmem:[%s0 + $0x38] sm:$0xf]
    %v107 = vld [vmem:[%s0 + $0x3c] sm:$0xf]
    %v108 = vld [vmem:[%s1] sm:$0xf]
    %v109 = vld [vmem:[%s1 + $0x4] sm:$0xf]
    %v110 = vld [vmem:[%s1 + $0x8] sm:$0xf]
    %v111 = vld [vmem:[%s1 + $0xc] sm:$0xf]
    %v112 = vld [vmem:[%s1 + $0x10] sm:$0xf]
    %v113 = vld [vmem:[%s1 + $0x14] sm:$0xf]
    %v114 = vld [vmem:[%s1 + $0x18] sm:$0xf]
    %v115 = vld [vmem:[%s1 + $0x1c] sm:$0xf]
    %v116 = vld [vmem:[%s1 + $0x20] sm:$0xf]
    %v117 = vld [vmem:[%s1 + $0x24] sm:$0xf]
    %v118 = vld [vmem:[%s1 + $0x28] sm:$0xf]
    %v119 = vld [vmem:[%s1 + $0x2c] sm:$0xf]
    %v120 = vld [vmem:[%s1 + $0x30] sm:$0xf]
    %v121 = vld [vmem:[%s1 + $0x34] sm:$0xf]
    %v122 = vld [vmem:[%s1 + $0x38] sm:$0xf]
    %v123 = vld [vmem:[%s1 + $0x3c] sm:$0xf]
    %v140 = vunpack.c.l.b16 %v92
    %v141 = vunpack.c.l.b16 %v93
    %v142 = vunpack.c.l.b16 %v94
    %v143 = vunpack.c.l.b16 %v95
    %v144 = vunpack.c.l.b16 %v96
    %v145 = vunpack.c.l.b16 %v97
    %v146 = vunpack.c.l.b16 %v98
    %v147 = vunpack.c.l.b16 %v99
    %v148 = vunpack.c.l.b16 %v100
    %v149 = vunpack.c.l.b16 %v101
    %v150 = vunpack.c.l.b16 %v102
    %v151 = vunpack.c.l.b16 %v103
    %v152 = vunpack.c.l.b16 %v104
    %v153 = vunpack.c.l.b16 %v105
    %v154 = vunpack.c.l.b16 %v106
    %v155 = vunpack.c.l.b16 %v107
    %v156 = vpack.c.b16 %v141, %v140
    %v157 = vpack.c.b16 %v143, %v142
    %v158 = vpack.c.b16 %v145, %v144
    %v159 = vpack.c.b16 %v147, %v146
    %v160 = vpack.c.b16 %v149, %v148
    %v161 = vpack.c.b16 %v151, %v150
    %v162 = vpack.c.b16 %v153, %v152
    %v163 = vpack.c.b16 %v155, %v154
    %v188 = vunpack.c.l.b16 %v108
    %v189 = vunpack.c.l.b16 %v109
    %v190 = vunpack.c.l.b16 %v110
    %v191 = vunpack.c.l.b16 %v111
    %v192 = vunpack.c.l.b16 %v112
    %v193 = vunpack.c.l.b16 %v113
    %v194 = vunpack.c.l.b16 %v114
    %v195 = vunpack.c.l.b16 %v115
    %v196 = vunpack.c.l.b16 %v116
    %v197 = vunpack.c.l.b16 %v117
    %v198 = vunpack.c.l.b16 %v118
    %v199 = vunpack.c.l.b16 %v119
    %v200 = vunpack.c.l.b16 %v120
    %v201 = vunpack.c.l.b16 %v121
    %v202 = vunpack.c.l.b16 %v122
    %v203 = vunpack.c.l.b16 %v123
    %v204 = vpack.c.b16 %v189, %v188
    %v205 = vpack.c.b16 %v191, %v190
    %v206 = vpack.c.b16 %v193, %v192
    %v207 = vpack.c.b16 %v195, %v194
    %v208 = vpack.c.b16 %v197, %v196
    %v209 = vpack.c.b16 %v199, %v198
    %v210 = vpack.c.b16 %v201, %v200
    %v211 = vpack.c.b16 %v203, %v202
    %220 = vmatpush.bf16.msra.mxu0 %v211
    %221 = vmatpush.bf16.msra.mxu0 %v210
    %222 = vmatpush.bf16.msra.mxu0 %v209
    %223 = vmatpush.bf16.msra.mxu0 %v208
    %224 = vmatpush.bf16.msra.mxu0 %v207
    %225 = vmatpush.bf16.msra.mxu0 %v206
    %226 = vmatpush.bf16.msra.mxu0 %v205
    %227 = vmatpush.bf16.msra.mxu0 %v204
    %228 = vmatmul.bf16.gmra.mxu0 %v156
    %v229 = vpop.f32.mrf.mxu0
    %v230 = vadd.f32 0.0, %v229
    %v231 = vpop.f32.mrf.mxu0
    %v232 = vadd.f32 0.0, %v231
    %233 = vmatmul.bf16.gmra.mxu0 %v157
    %v234 = vpop.f32.mrf.mxu0
    %v235 = vadd.f32 0.0, %v234
    %v236 = vpop.f32.mrf.mxu0
    %v237 = vadd.f32 0.0, %v236
    %238 = vmatmul.bf16.gmra.mxu0 %v158
    %v239 = vpop.f32.mrf.mxu0
    %v240 = vadd.f32 0.0, %v239
    %v241 = vpop.f32.mrf.mxu0
    %v242 = vadd.f32 0.0, %v241
    %243 = vmatmul.bf16.gmra.mxu0 %v159
    %v244 = vpop.f32.mrf.mxu0
    %v245 = vadd.f32 0.0, %v244
    %v246 = vpop.f32.mrf.mxu0
    %v247 = vadd.f32 0.0, %v246
    %248 = vmatmul.bf16.gmra.mxu0 %v160
    %v249 = vpop.f32.mrf.mxu0
    %v250 = vadd.f32 0.0, %v249
    %v251 = vpop.f32.mrf.mxu0
    %v252 = vadd.f32 0.0, %v251
    %253 = vmatmul.bf16.gmra.mxu0 %v161
    %v254 = vpop.f32.mrf.mxu0
    %v255 = vadd.f32 0.0, %v254
    %v256 = vpop.f32.mrf.mxu0
    %v257 = vadd.f32 0.0, %v256
    %258 = vmatmul.bf16.gmra.mxu0 %v162
    %v259 = vpop.f32.mrf.mxu0
    %v260 = vadd.f32 0.0, %v259
    %v261 = vpop.f32.mrf.mxu0
    %v262 = vadd.f32 0.0, %v261
    %263 = vmatmul.bf16.gmra.mxu0 %v163
    %v264 = vpop.f32.mrf.mxu0
    %v265 = vadd.f32 0.0, %v264
    %v266 = vpop.f32.mrf.mxu0
    %v267 = vadd.f32 0.0, %v266
    %268 = vdwg.mxu0
    %v269 = vadd.f32 %v76, %v230
    %v270 = vadd.f32 %v77, %v232
    %v271 = vadd.f32 %v78, %v235
    %v272 = vadd.f32 %v79, %v237
    %v273 = vadd.f32 %v80, %v240
    %v274 = vadd.f32 %v81, %v242
    %v275 = vadd.f32 %v82, %v245
    %v276 = vadd.f32 %v83, %v247
    %v277 = vadd.f32 %v84, %v250
    %v278 = vadd.f32 %v85, %v252
    %v279 = vadd.f32 %v86, %v255
    %v280 = vadd.f32 %v87, %v257
    %v281 = vadd.f32 %v88, %v260
    %v282 = vadd.f32 %v89, %v262
    %v283 = vadd.f32 %v90, %v265
    %v284 = vadd.f32 %v91, %v267
    %285 = vst [vmem:[#allocation2] sm:$0xff] %v269
    %286 = vst [vmem:[#allocation2 + $0x8] sm:$0xff] %v270
    %287 = vst [vmem:[#allocation2 + $0x10] sm:$0xff] %v271
    %288 = vst [vmem:[#allocation2 + $0x18] sm:$0xff] %v272
    %289 = vst [vmem:[#allocation2 + $0x20] sm:$0xff] %v273
    %290 = vst [vmem:[#allocation2 + $0x28] sm:$0xff] %v274
    %291 = vst [vmem:[#allocation2 + $0x30] sm:$0xff] %v275
    %292 = vst [vmem:[#allocation2 + $0x38] sm:$0xff] %v276
    %293 = vst [vmem:[#allocation2 + $0x40] sm:$0xff] %v277
    %294 = vst [vmem:[#allocation2 + $0x48] sm:$0xff] %v278
    %295 = vst [vmem:[#allocation2 + $0x50] sm:$0xff] %v279
    %296 = vst [vmem:[#allocation2 + $0x58] sm:$0xff] %v280
    %297 = vst [vmem:[#allocation2 + $0x60] sm:$0xff] %v281
    %298 = vst [vmem:[#allocation2 + $0x68] sm:$0xff] %v282
    %299 = vst [vmem:[#allocation2 + $0x70] sm:$0xff] %v283
    %300 = vst [vmem:[#allocation2 + $0x78] sm:$0xff] %v284
    // Predicated region
    $region38: #{tpu_custom_call.1} parent=1 // pred_check
      %p301 = pneg %p56
    $region39: #{tpu_custom_call.1} parent=1 // pred_check_branch
      %303 = sbr.rel (%p301) target = $region41
    $region40: #{tpu_custom_call.1} parent=1 // pred_region
      %v304 = vld [vmem:[#allocation2] sm:$0xff]
      %v305 = vld [vmem:[#allocation2 + $0x8] sm:$0xff]
      %v306 = vld [vmem:[#allocation2 + $0x10] sm:$0xff]
      %v307 = vld [vmem:[#allocation2 + $0x18] sm:$0xff]
      %v308 = vld [vmem:[#allocation2 + $0x20] sm:$0xff]
      %v309 = vld [vmem:[#allocation2 + $0x28] sm:$0xff]
      %v310 = vld [vmem:[#allocation2 + $0x30] sm:$0xff]
      %v311 = vld [vmem:[#allocation2 + $0x38] sm:$0xff]
      %v312 = vld [vmem:[#allocation2 + $0x40] sm:$0xff]
      %v313 = vld [vmem:[#allocation2 + $0x48] sm:$0xff]
      %v314 = vld [vmem:[#allocation2 + $0x50] sm:$0xff]
      %v315 = vld [vmem:[#allocation2 + $0x58] sm:$0xff]
      %v316 = vld [vmem:[#allocation2 + $0x60] sm:$0xff]
      %v317 = vld [vmem:[#allocation2 + $0x68] sm:$0xff]
      %v318 = vld [vmem:[#allocation2 + $0x70] sm:$0xff]
      %v319 = vld [vmem:[#allocation2 + $0x78] sm:$0xff]
      %v320 = vld [vmem:[%s3] sm:$0xff]
      %v321 = vld [vmem:[%s3 + $0x8] sm:$0xff]
      %v322 = vld [vmem:[%s3 + $0x10] sm:$0xff]
      %v323 = vld [vmem:[%s3 + $0x18] sm:$0xff]
      %v324 = vld [vmem:[%s3 + $0x20] sm:$0xff]
      %v325 = vld [vmem:[%s3 + $0x28] sm:$0xff]
      %v326 = vld [vmem:[%s3 + $0x30] sm:$0xff]
      %v327 = vld [vmem:[%s3 + $0x38] sm:$0xff]
      %v328 = vld [vmem:[%s3 + $0x40] sm:$0xff]
      %v329 = vld [vmem:[%s3 + $0x48] sm:$0xff]
      %v330 = vld [vmem:[%s3 + $0x50] sm:$0xff]
      %v331 = vld [vmem:[%s3 + $0x58] sm:$0xff]
      %v332 = vld [vmem:[%s3 + $0x60] sm:$0xff]
      %v333 = vld [vmem:[%s3 + $0x68] sm:$0xff]
      %v334 = vld [vmem:[%s3 + $0x70] sm:$0xff]
      %v335 = vld [vmem:[%s3 + $0x78] sm:$0xff]
      %337 = vset.pattern.permute.xlu0 0
      %338 = vperm.xlu0 %337, %v320
      %v339 = vpop.permute.xlu0 %338
      %342 = vset.pattern.permute.xlu0 0
      %343 = vperm.xlu0 %342, %v321
      %v344 = vpop.permute.xlu0 %343
      %347 = vset.pattern.permute.xlu0 0
      %348 = vperm.xlu0 %347, %v322
      %v349 = vpop.permute.xlu0 %348
      %352 = vset.pattern.permute.xlu0 0
      %353 = vperm.xlu0 %352, %v323
      %v354 = vpop.permute.xlu0 %353
      %357 = vset.pattern.permute.xlu0 0
      %358 = vperm.xlu0 %357, %v324
      %v359 = vpop.permute.xlu0 %358
      %362 = vset.pattern.permute.xlu0 0
      %363 = vperm.xlu0 %362, %v325
      %v364 = vpop.permute.xlu0 %363
      %367 = vset.pattern.permute.xlu0 0
      %368 = vperm.xlu0 %367, %v326
      %v369 = vpop.permute.xlu0 %368
      %372 = vset.pattern.permute.xlu0 0
      %373 = vperm.xlu0 %372, %v327
      %v374 = vpop.permute.xlu0 %373
      %377 = vset.pattern.permute.xlu0 0
      %378 = vperm.xlu0 %377, %v328
      %v379 = vpop.permute.xlu0 %378
      %382 = vset.pattern.permute.xlu0 0
      %383 = vperm.xlu0 %382, %v329
      %v384 = vpop.permute.xlu0 %383
      %387 = vset.pattern.permute.xlu0 0
      %388 = vperm.xlu0 %387, %v330
      %v389 = vpop.permute.xlu0 %388
      %392 = vset.pattern.permute.xlu0 0
      %393 = vperm.xlu0 %392, %v331
      %v394 = vpop.permute.xlu0 %393
      %397 = vset.pattern.permute.xlu0 0
      %398 = vperm.xlu0 %397, %v332
      %v399 = vpop.permute.xlu0 %398
      %402 = vset.pattern.permute.xlu0 0
      %403 = vperm.xlu0 %402, %v333
      %v404 = vpop.permute.xlu0 %403
      %407 = vset.pattern.permute.xlu0 0
      %408 = vperm.xlu0 %407, %v334
      %v409 = vpop.permute.xlu0 %408
      %412 = vset.pattern.permute.xlu0 0
      %413 = vperm.xlu0 %412, %v335
      %v414 = vpop.permute.xlu0 %413
      %v416 = vmul.f32 %v304, %v339
      %v417 = vmul.f32 %v305, %v344
      %v418 = vmul.f32 %v306, %v349
      %v419 = vmul.f32 %v307, %v354
      %v420 = vmul.f32 %v308, %v359
      %v421 = vmul.f32 %v309, %v364
      %v422 = vmul.f32 %v310, %v369
      %v423 = vmul.f32 %v311, %v374
      %v424 = vmul.f32 %v312, %v379
      %v425 = vmul.f32 %v313, %v384
      %v426 = vmul.f32 %v314, %v389
      %v427 = vmul.f32 %v315, %v394
      %v428 = vmul.f32 %v316, %v399
      %v429 = vmul.f32 %v317, %v404
      %v430 = vmul.f32 %v318, %v409
      %v431 = vmul.f32 %v319, %v414
      %v432 = vld [vmem:[#allocation6] sm:$0xff]
      %v433 = vld [vmem:[#allocation6 + $0x8] sm:$0xff]
      %v434 = vld [vmem:[#allocation6 + $0x10] sm:$0xff]
      %v435 = vld [vmem:[#allocation6 + $0x18] sm:$0xff]
      %v436 = vld [vmem:[#allocation6 + $0x20] sm:$0xff]
      %v437 = vld [vmem:[#allocation6 + $0x28] sm:$0xff]
      %v438 = vld [vmem:[#allocation6 + $0x30] sm:$0xff]
      %v439 = vld [vmem:[#allocation6 + $0x38] sm:$0xff]
      %v440 = vld [vmem:[#allocation6 + $0x40] sm:$0xff]
      %v441 = vld [vmem:[#allocation6 + $0x48] sm:$0xff]
      %v442 = vld [vmem:[#allocation6 + $0x50] sm:$0xff]
      %v443 = vld [vmem:[#allocation6 + $0x58] sm:$0xff]
      %v444 = vld [vmem:[#allocation6 + $0x60] sm:$0xff]
      %v445 = vld [vmem:[#allocation6 + $0x68] sm:$0xff]
      %v446 = vld [vmem:[#allocation6 + $0x70] sm:$0xff]
      %v447 = vld [vmem:[#allocation6 + $0x78] sm:$0xff]
      %v448 = vld [vmem:[#allocation3] sm:$0xf]
      %v449 = vld [vmem:[#allocation3 + $0x4] sm:$0xf]
      %v450 = vld [vmem:[#allocation3 + $0x8] sm:$0xf]
      %v451 = vld [vmem:[#allocation3 + $0xc] sm:$0xf]
      %v452 = vld [vmem:[#allocation3 + $0x10] sm:$0xf]
      %v453 = vld [vmem:[#allocation3 + $0x14] sm:$0xf]
      %v454 = vld [vmem:[#allocation3 + $0x18] sm:$0xf]
      %v455 = vld [vmem:[#allocation3 + $0x1c] sm:$0xf]
      %v456 = vld [vmem:[#allocation3 + $0x20] sm:$0xf]
      %v457 = vld [vmem:[#allocation3 + $0x24] sm:$0xf]
      %v458 = vld [vmem:[#allocation3 + $0x28] sm:$0xf]
      %v459 = vld [vmem:[#allocation3 + $0x2c] sm:$0xf]
      %v460 = vld [vmem:[#allocation3 + $0x30] sm:$0xf]
      %v461 = vld [vmem:[#allocation3 + $0x34] sm:$0xf]
      %v462 = vld [vmem:[#allocation3 + $0x38] sm:$0xf]
      %v463 = vld [vmem:[#allocation3 + $0x3c] sm:$0xf]
      %v464 = vunpack.c.l.bf16 %v448
      %v465 = vunpack.c.l.bf16 %v449
      %v466 = vunpack.c.l.bf16 %v450
      %v467 = vunpack.c.l.bf16 %v451
      %v468 = vunpack.c.l.bf16 %v452
      %v469 = vunpack.c.l.bf16 %v453
      %v470 = vunpack.c.l.bf16 %v454
      %v471 = vunpack.c.l.bf16 %v455
      %v472 = vunpack.c.l.bf16 %v456
      %v473 = vunpack.c.l.bf16 %v457
      %v474 = vunpack.c.l.bf16 %v458
      %v475 = vunpack.c.l.bf16 %v459
      %v476 = vunpack.c.l.bf16 %v460
      %v477 = vunpack.c.l.bf16 %v461
      %v478 = vunpack.c.l.bf16 %v462
      %v479 = vunpack.c.l.bf16 %v463
      %v480 = vld [vmem:[#allocation6 + $0x80] sm:$0xff]
      %v481 = vld [vmem:[#allocation6 + $0x88] sm:$0xff]
      %v482 = vld [vmem:[#allocation6 + $0x90] sm:$0xff]
      %v483 = vld [vmem:[#allocation6 + $0x98] sm:$0xff]
      %v484 = vld [vmem:[#allocation6 + $0xa0] sm:$0xff]
      %v485 = vld [vmem:[#allocation6 + $0xa8] sm:$0xff]
      %v486 = vld [vmem:[#allocation6 + $0xb0] sm:$0xff]
      %v487 = vld [vmem:[#allocation6 + $0xb8] sm:$0xff]
      %v488 = vld [vmem:[#allocation6 + $0xc0] sm:$0xff]
      %v489 = vld [vmem:[#allocation6 + $0xc8] sm:$0xff]
      %v490 = vld [vmem:[#allocation6 + $0xd0] sm:$0xff]
      %v491 = vld [vmem:[#allocation6 + $0xd8] sm:$0xff]
      %v492 = vld [vmem:[#allocation6 + $0xe0] sm:$0xff]
      %v493 = vld [vmem:[#allocation6 + $0xe8] sm:$0xff]
      %v494 = vld [vmem:[#allocation6 + $0xf0] sm:$0xff]
      %v495 = vld [vmem:[#allocation6 + $0xf8] sm:$0xff]
      %496 = vmatpush.msra.mxu0 %v495
      %497 = vmatpush.msra.mxu0 %v494
      %498 = vmatpush.msra.mxu0 %v493
      %499 = vmatpush.msra.mxu0 %v492
      %500 = vmatpush.msra.mxu0 %v491
      %501 = vmatpush.msra.mxu0 %v490
      %502 = vmatpush.msra.mxu0 %v489
      %503 = vmatpush.msra.mxu0 %v488
      %504 = vmatpush.msra.mxu0 %v487
      %505 = vmatpush.msra.mxu0 %v486
      %506 = vmatpush.msra.mxu0 %v485
      %507 = vmatpush.msra.mxu0 %v484
      %508 = vmatpush.msra.mxu0 %v483
      %509 = vmatpush.msra.mxu0 %v482
      %510 = vmatpush.msra.mxu0 %v481
      %511 = vmatpush.msra.mxu0 %v480
      %512 = vmatmul.f32.gmra.mxu0 %v464
      %v513 = vpop.f32.mrf.mxu0
      %v514 = vadd.f32 0.0, %v513
      %515 = vmatmul.f32.gmra.mxu0 %v465
      %v516 = vpop.f32.mrf.mxu0
      %v517 = vadd.f32 0.0, %v516
      %518 = vmatmul.f32.gmra.mxu0 %v466
      %v519 = vpop.f32.mrf.mxu0
      %v520 = vadd.f32 0.0, %v519
      %521 = vmatmul.f32.gmra.mxu0 %v467
      %v522 = vpop.f32.mrf.mxu0
      %v523 = vadd.f32 0.0, %v522
      %524 = vmatmul.f32.gmra.mxu0 %v468
      %v525 = vpop.f32.mrf.mxu0
      %v526 = vadd.f32 0.0, %v525
      %527 = vmatmul.f32.gmra.mxu0 %v469
      %v528 = vpop.f32.mrf.mxu0
      %v529 = vadd.f32 0.0, %v528
      %530 = vmatmul.f32.gmra.mxu0 %v470
      %v531 = vpop.f32.mrf.mxu0
      %v532 = vadd.f32 0.0, %v531
      %533 = vmatmul.f32.gmra.mxu0 %v471
      %v534 = vpop.f32.mrf.mxu0
      %v535 = vadd.f32 0.0, %v534
      %536 = vmatmul.f32.gmra.mxu0 %v472
      %v537 = vpop.f32.mrf.mxu0
      %v538 = vadd.f32 0.0, %v537
      %539 = vmatmul.f32.gmra.mxu0 %v473
      %v540 = vpop.f32.mrf.mxu0
      %v541 = vadd.f32 0.0, %v540
      %542 = vmatmul.f32.gmra.mxu0 %v474
      %v543 = vpop.f32.mrf.mxu0
      %v544 = vadd.f32 0.0, %v543
      %545 = vmatmul.f32.gmra.mxu0 %v475
      %v546 = vpop.f32.mrf.mxu0
      %v547 = vadd.f32 0.0, %v546
      %548 = vmatmul.f32.gmra.mxu0 %v476
      %v549 = vpop.f32.mrf.mxu0
      %v550 = vadd.f32 0.0, %v549
      %551 = vmatmul.f32.gmra.mxu0 %v477
      %v552 = vpop.f32.mrf.mxu0
      %v553 = vadd.f32 0.0, %v552
      %554 = vmatmul.f32.gmra.mxu0 %v478
      %v555 = vpop.f32.mrf.mxu0
      %v556 = vadd.f32 0.0, %v555
      %557 = vmatmul.f32.gmra.mxu0 %v479
      %v558 = vpop.f32.mrf.mxu0
      %v559 = vadd.f32 0.0, %v558
      %560 = vdwg.mxu0
      %561 = vmatpush.msra.mxu0 %v447
      %562 = vmatpush.msra.mxu0 %v446
      %563 = vmatpush.msra.mxu0 %v445
      %564 = vmatpush.msra.mxu0 %v444
      %565 = vmatpush.msra.mxu0 %v443
      %566 = vmatpush.msra.mxu0 %v442
      %567 = vmatpush.msra.mxu0 %v441
      %568 = vmatpush.msra.mxu0 %v440
      %569 = vmatpush.msra.mxu0 %v439
      %570 = vmatpush.msra.mxu0 %v438
      %571 = vmatpush.msra.mxu0 %v437
      %572 = vmatpush.msra.mxu0 %v436
      %573 = vmatpush.msra.mxu0 %v435
      %574 = vmatpush.msra.mxu0 %v434
      %575 = vmatpush.msra.mxu0 %v433
      %576 = vmatpush.msra.mxu0 %v432
      %577 = vmatmul.f32.gmra.mxu0 %v416
      %v578 = vpop.f32.mrf.mxu0
      %v579 = vadd.f32 %v514, %v578
      %580 = vmatmul.f32.gmra.mxu0 %v417
      %v581 = vpop.f32.mrf.mxu0
      %v582 = vadd.f32 %v517, %v581
      %583 = vmatmul.f32.gmra.mxu0 %v418
      %v584 = vpop.f32.mrf.mxu0
      %v585 = vadd.f32 %v520, %v584
      %586 = vmatmul.f32.gmra.mxu0 %v419
      %v587 = vpop.f32.mrf.mxu0
      %v588 = vadd.f32 %v523, %v587
      %589 = vmatmul.f32.gmra.mxu0 %v420
      %v590 = vpop.f32.mrf.mxu0
      %v591 = vadd.f32 %v526, %v590
      %592 = vmatmul.f32.gmra.mxu0 %v421
      %v593 = vpop.f32.mrf.mxu0
      %v594 = vadd.f32 %v529, %v593
      %595 = vmatmul.f32.gmra.mxu0 %v422
      %v596 = vpop.f32.mrf.mxu0
      %v597 = vadd.f32 %v532, %v596
      %598 = vmatmul.f32.gmra.mxu0 %v423
      %v599 = vpop.f32.mrf.mxu0
      %v600 = vadd.f32 %v535, %v599
      %601 = vmatmul.f32.gmra.mxu0 %v424
      %v602 = vpop.f32.mrf.mxu0
      %v603 = vadd.f32 %v538, %v602
      %604 = vmatmul.f32.gmra.mxu0 %v425
      %v605 = vpop.f32.mrf.mxu0
      %v606 = vadd.f32 %v541, %v605
      %607 = vmatmul.f32.gmra.mxu0 %v426
      %v608 = vpop.f32.mrf.mxu0
      %v609 = vadd.f32 %v544, %v608
      %610 = vmatmul.f32.gmra.mxu0 %v427
      %v611 = vpop.f32.mrf.mxu0
      %v612 = vadd.f32 %v547, %v611
      %613 = vmatmul.f32.gmra.mxu0 %v428
      %v614 = vpop.f32.mrf.mxu0
      %v615 = vadd.f32 %v550, %v614
      %616 = vmatmul.f32.gmra.mxu0 %v429
      %v617 = vpop.f32.mrf.mxu0
      %v618 = vadd.f32 %v553, %v617
      %619 = vmatmul.f32.gmra.mxu0 %v430
      %v620 = vpop.f32.mrf.mxu0
      %v621 = vadd.f32 %v556, %v620
      %622 = vmatmul.f32.gmra.mxu0 %v431
      %v623 = vpop.f32.mrf.mxu0
      %v624 = vadd.f32 %v559, %v623
      %625 = vdwg.mxu0
      %v626 = vld [vmem:[%s5] sm:$0x1]
      %v628 = vperm.slane %v626, 0
      %v630 = vadd.f32 %v579, %v628
      %v631 = vadd.f32 %v582, %v628
      %v632 = vadd.f32 %v585, %v628
      %v633 = vadd.f32 %v588, %v628
      %v634 = vadd.f32 %v591, %v628
      %v635 = vadd.f32 %v594, %v628
      %v636 = vadd.f32 %v597, %v628
      %v637 = vadd.f32 %v600, %v628
      %v638 = vadd.f32 %v603, %v628
      %v639 = vadd.f32 %v606, %v628
      %v640 = vadd.f32 %v609, %v628
      %v641 = vadd.f32 %v612, %v628
      %v642 = vadd.f32 %v615, %v628
      %v643 = vadd.f32 %v618, %v628
      %v644 = vadd.f32 %v621, %v628
      %v645 = vadd.f32 %v624, %v628
      %v646 = vmul.f32 %v630, 0.2
      %v647 = vmul.f32 %v631, 0.2
      %v648 = vmul.f32 %v632, 0.2
      %v649 = vmul.f32 %v633, 0.2
      %v650 = vmul.f32 %v634, 0.2
      %v651 = vmul.f32 %v635, 0.2
      %v652 = vmul.f32 %v636, 0.2
      %v653 = vmul.f32 %v637, 0.2
      %v654 = vmul.f32 %v638, 0.2
      %v655 = vmul.f32 %v639, 0.2
      %v656 = vmul.f32 %v640, 0.2
      %v657 = vmul.f32 %v641, 0.2
      %v658 = vmul.f32 %v642, 0.2
      %v659 = vmul.f32 %v643, 0.2
      %v660 = vmul.f32 %v644, 0.2
      %v661 = vmul.f32 %v645, 0.2
      %v662 = vmax.f32 %v630, %v646
      %v663 = vmax.f32 %v631, %v647
      %v664 = vmax.f32 %v632, %v648
      %v665 = vmax.f32 %v633, %v649
      %v666 = vmax.f32 %v634, %v650
      %v667 = vmax.f32 %v635, %v651
      %v668 = vmax.f32 %v636, %v652
      %v669 = vmax.f32 %v637, %v653
      %v670 = vmax.f32 %v638, %v654
      %v671 = vmax.f32 %v639, %v655
      %v672 = vmax.f32 %v640, %v656
      %v673 = vmax.f32 %v641, %v657
      %v674 = vmax.f32 %v642, %v658
      %v675 = vmax.f32 %v643, %v659
      %v676 = vmax.f32 %v644, %v660
      %v677 = vmax.f32 %v645, %v661
      %v678 = vpack.c.bf16 %v662, %v662
      %v679 = vpack.c.bf16 %v663, %v663
      %v680 = vpack.c.bf16 %v664, %v664
      %v681 = vpack.c.bf16 %v665, %v665
      %v682 = vpack.c.bf16 %v666, %v666
      %v683 = vpack.c.bf16 %v667, %v667
      %v684 = vpack.c.bf16 %v668, %v668
      %v685 = vpack.c.bf16 %v669, %v669
      %v686 = vpack.c.bf16 %v670, %v670
      %v687 = vpack.c.bf16 %v671, %v671
      %v688 = vpack.c.bf16 %v672, %v672
      %v689 = vpack.c.bf16 %v673, %v673
      %v690 = vpack.c.bf16 %v674, %v674
      %v691 = vpack.c.bf16 %v675, %v675
      %v692 = vpack.c.bf16 %v676, %v676
      %v693 = vpack.c.bf16 %v677, %v677
      %694 = vst [vmem:[#allocation8] sm:$0xf] %v678
      %695 = vst [vmem:[#allocation8 + $0x4] sm:$0xf] %v679
      %696 = vst [vmem:[#allocation8 + $0x8] sm:$0xf] %v680
      %697 = vst [vmem:[#allocation8 + $0xc] sm:$0xf] %v681
      %698 = vst [vmem:[#allocation8 + $0x10] sm:$0xf] %v682
      %699 = vst [vmem:[#allocation8 + $0x14] sm:$0xf] %v683
      %700 = vst [vmem:[#allocation8 + $0x18] sm:$0xf] %v684
      %701 = vst [vmem:[#allocation8 + $0x1c] sm:$0xf] %v685
      %702 = vst [vmem:[#allocation8 + $0x20] sm:$0xf] %v686
      %703 = vst [vmem:[#allocation8 + $0x24] sm:$0xf] %v687
      %704 = vst [vmem:[#allocation8 + $0x28] sm:$0xf] %v688
      %705 = vst [vmem:[#allocation8 + $0x2c] sm:$0xf] %v689
      %706 = vst [vmem:[#allocation8 + $0x30] sm:$0xf] %v690
      %707 = vst [vmem:[#allocation8 + $0x34] sm:$0xf] %v691
      %708 = vst [vmem:[#allocation8 + $0x38] sm:$0xf] %v692
      %709 = vst [vmem:[#allocation8 + $0x3c] sm:$0xf] %v693
    $region41: #{tpu_custom_call.1} parent=1 // pred_fallthru
      _
    // Predicated region
    $region42: #{tpu_custom_call.1} parent=1 // pred_check
      _
    $region43: #{tpu_custom_call.1} parent=1 // pred_check_branch
      %711 = sbr.rel (0) target = $region45
    $region44: #{tpu_custom_call.1} parent=1 // pred_region
      %713 = vsyncadd [#allocation5], 0
      %s714 = sshll.u32 [#allocation8], 4
      %s715 = int_to_ptr.vmem [resolvable:$true] %s714
      %s716 = sshll.u32 %s6, 4
      %s717 = int_to_ptr.hbm [resolvable:$true] %s716
      %722 = dma.vmem_to_hbm [thread:$0]  %s715, 1024, %s717, [#allocation5], 64, 64, 4
    $region45: #{tpu_custom_call.1} parent=1 // pred_fallthru
      _
    // Predicated region
    $region46: #{tpu_custom_call.1} parent=1 // pred_check
      _
    $region47: #{tpu_custom_call.1} parent=1 // pred_check_branch
      %724 = sbr.rel (0) target = $region49
    $region48: #{tpu_custom_call.1} parent=1 // pred_region
      %726 = dma.done [#allocation5], 1024
    $region49: #{tpu_custom_call.1} parent=1 // pred_fallthru
      _
    %727 = vsyncpa [#allocation4], 1
    %728 = vsyncpa [#allocation7], 1
    %729 = vsyncpa [#allocation5], 1

</llo_original>
